<compile_context>
chip_gen: v7x
topology: tpu7x:2x2x1
jax: 0.10.0
libtpu: 0.0.40
codegen_flags: <defaults>
</compile_context>

<pallas_src>
import functools

import jax
import jax.numpy as jnp
from jax import lax
from jax.experimental import pallas as pl
from jax.experimental.pallas import tpu as pltpu

BN_EPS = 1e-5
_VMEM_LIMIT = 48 * 1024 * 1024    # scoped-VMEM cap; leaves headroom on v7x (64 MiB)
_VMEM_BUDGET = 40 * 1024 * 1024   # tile-sizing budget (v7x-safe)
_Y_DTYPE = jnp.bfloat16           # dtype of the pre-BN intermediate y


def _pick_tile_rows(h_out, *, stride, k, dil, x_slab_bytes, w_bytes,
                    wpadc_in, wc_in, wc_out):
    """Largest TH that divides H_out, is a multiple of 8, <=256, and keeps the
    per-grid-step VMEM footprint under a v7x-safe budget."""
    if h_out % 8 != 0:
        # TODO(synk): VMEM guard for large irregular maps (single-tile fallback).
        return h_out
    best = 8
    for t in range(8, min(h_out, 256) + 1, 8):
        if h_out % t:
            continue
        in_rows = (t - 1) * stride + (k - 1) * dil + 1
        per_tile = (in_rows * wpadc_in * 4      # ReLU'd input window (f32)
                    + 2 * t * wc_in * 4         # dw accumulator + tap temp
                    + t * wc_out * 4            # f32 y before the down-cast
                    + 2 * t * wc_out * 2)       # double-buffered bf16 y tile
        if 2 * x_slab_bytes + w_bytes + per_tile <= _VMEM_BUDGET:
            best = t
    return best


def _conv_stats_kernel(x_ref, wdw_ref, wpw_ref, y_ref, st_ref, *,
                       k, dil, stride, th, w_out, c_in, c_out, use_kron):
    """ReLU + depthwise dilated conv + 1x1 conv + BN partial sums, one tile.

    x_ref  : (1, H_pad, W_pad*C_in)     full padded slab of one batch element (f32)
    wdw_ref: (k*k, W_out*C_in)          per-tap depthwise weights, lane-packed
    wpw_ref: (W_out*C_in, W_out*C_out)  block-diag kron(I_W, W_pw)   [use_kron]
             (C_in, C_out)              dense pointwise weight       [otherwise]
    y_ref  : (1, TH, W_out*C_out)       pre-BN activations, lane dense (bf16)
    st_ref : (1, 1, 2, W_out*C_out)     row 0 = sum(y), row 1 = sum(y*y)  (f32)
    """
    wc_in = w_out * c_in
    h_idx = pl.program_id(1)

    in_rows = (th - 1) * stride + (k - 1) * dil + 1
    row0 = h_idx * (th * stride)
    if (th * stride) % 8 == 0:
        row0 = pl.multiple_of(row0, 8)

    # ReLU once on the tile-local window (relu(0) == 0, so applying it to the
    # zero-padded input equals padding after the ReLU).
    xin = jnp.maximum(x_ref[0, pl.ds(row0, in_rows), :], 0.0)

    wdw = wdw_ref[...]                                    # (k*k, W_out*C_in)
    w_pad = xin.shape[-1] // c_in

    # Depthwise dilated conv: accumulate k*k shifted lane-dense windows
    # (accumulator initialized with tap 0 -> no zeros + extra add).
    dw = None
    for kh in range(k):
        if stride == 1:
            rows = xin[kh * dil: kh * dil + th, :]
        else:
            rows = xin[kh * dil: kh * dil + (th - 1) * stride + 1: stride, :]
        if stride > 1 and dil % stride == 0:
            # Hoist the column decimation out of the kw loop: one lane gather
            # per kh, then contiguous slices per tap.
            n_dec = (w_pad - 1) // stride + 1
            rows_dec = rows.reshape(th, w_pad, c_in)[:, ::stride, :]
            rows_dec = rows_dec.reshape(th, n_dec * c_in)
        for kw in range(k):
            if stride == 1:
                col0 = kw * dil * c_in
                win = rows[:, col0:col0 + wc_in]
            elif dil % stride == 0:
                col0 = (kw * dil // stride) * c_in
                win = rows_dec[:, col0:col0 + wc_in]
            else:
                col0 = kw * dil * c_in
                span = ((w_out - 1) * stride + 1) * c_in
                win = rows[:, col0:col0 + span]
                win = win.reshape(th, (w_out - 1) * stride + 1, c_in)
                win = win[:, ::stride, :].reshape(th, wc_in)
            tap = kh * k + kw
            term = win * wdw[tap:tap + 1, :]
            dw = term if dw is None else dw + term        # (TH, W_out*C_in) f32

    # Pointwise 1x1 conv on the MXU (f32 accumulate).
    if use_kron:
        # Lane-dense matmul against kron(I_W, W_pw): no relayout between the
        # depthwise accumulate and the lane-dense store.
        y = jnp.dot(dw, wpw_ref[...], preferred_element_type=jnp.float32)
    else:
        # Dense (C_in, C_out) matmul; one relayout per tile, amortized over TH.
        y = jnp.dot(dw.reshape(th * w_out, c_in), wpw_ref[...],
                    preferred_element_type=jnp.float32)
        y = y.reshape(th, w_out * c_out)

    # BN partial statistics in f32 while y is hot (sublane-only reduction).
    psum = jnp.sum(y, axis=0, keepdims=True)              # (1, W_out*C_out)
    psq = jnp.sum(y * y, axis=0, keepdims=True)
    row_id = lax.broadcasted_iota(jnp.int32, (2, y.shape[-1]), 0)
    st_ref[0, 0] = jnp.where(row_id == 0, psum, psq)      # (2, W_out*C_out)

    y_ref[0] = y.astype(y_ref.dtype)                      # bf16 store


def _bn_apply_kernel(y_ref, scale_ref, shift_ref, o_ref):
    # y_ref / o_ref: (1, TH, W_out*C_out) bf16 (aliased); scale/shift: (1, WC_out) f32
    y = y_ref[0].astype(jnp.float32)      # compute in f32 (v5e has no bf16 VPU)
    o_ref[0] = (y * scale_ref[...] + shift_ref[...]).astype(o_ref.dtype)


def dil_conv(x_nchw, w_dw, w_pw, gamma, beta, *, stride, padding, dilation):
    """x_nchw: (N, C_in, H, W); w_dw: (C_in, 1, k, k); w_pw: (C_out, C_in, 1, 1)."""
    N, C_in, H, W = x_nchw.shape
    k = w_dw.shape[-1]
    C_out = w_pw.shape[0]
    H_out = (H + 2 * padding - dilation * (k - 1) - 1) // stride + 1
    W_out = (W + 2 * padding - dilation * (k - 1) - 1) // stride + 1
    H_pad, W_pad = H + 2 * padding, W + 2 * padding
    WC_in, WC_out = W_out * C_in, W_out * C_out

    use_kron = WC_in <= 256
    wpw_bytes = (WC_in * WC_out if use_kron else C_in * C_out) * 4
    TH = _pick_tile_rows(H_out, stride=stride, k=k, dil=dilation,
                         x_slab_bytes=H_pad * W_pad * C_in * 4,
                         w_bytes=wpw_bytes + k * k * WC_in * 4,
                         wpadc_in=W_pad * C_in, wc_in=WC_in, wc_out=WC_out)
    n_h = H_out // TH

    # ---- glue: pack input (single fused XLA transpose+pad+reshape) ----------
    x_nhwc = jnp.transpose(x_nchw, (0, 2, 3, 1)).astype(jnp.float32)
    x_packed = jnp.pad(
        x_nhwc, ((0, 0), (padding, padding), (padding, padding), (0, 0))
    ).reshape(N, H_pad, W_pad * C_in)

    # Depthwise weights, one lane-packed row per tap:
    #   wdw_packed[kh*k+kw, w*C_in+c] = w_dw[c, 0, kh, kw]
    taps = jnp.transpose(w_dw[:, 0, :, :], (1, 2, 0)).reshape(k * k, C_in)
    wdw_packed = jnp.tile(taps.astype(jnp.float32), (1, W_out))

    # Pointwise weights: dense (C_in, C_out), and block-diag kron(I_W, .) only
    # while the W_out x FLOP / VMEM inflation is negligible.
    wpw2 = jnp.transpose(w_pw[:, :, 0, 0], (1, 0)).astype(jnp.float32)
    if use_kron:
        wpw_arg = jnp.kron(jnp.eye(W_out, dtype=jnp.float32), wpw2)
        wpw_spec = pl.BlockSpec((WC_in, WC_out), lambda n, h: (0, 0))
        pw_flops = 2 * N * H_out * WC_in * WC_out
    else:
        wpw_arg = wpw2
        wpw_spec = pl.BlockSpec((C_in, C_out), lambda n, h: (0, 0))
        pw_flops = 2 * N * H_out * W_out * C_in * C_out

    # ---- pass 1: conv + per-tile BN partial sums -----------------------------
    conv_flops = pw_flops + 2 * N * H_out * k * k * WC_in
    conv_bytes = (4 * (x_packed.size + wdw_packed.size + wpw_arg.size)
                  + 2 * N * H_out * WC_out          # bf16 y write
                  + 4 * N * n_h * 2 * WC_out)       # f32 stats write
    y_packed, stats = pl.pallas_call(
        functools.partial(_conv_stats_kernel, k=k, dil=dilation, stride=stride,
                          th=TH, w_out=W_out, c_in=C_in, c_out=C_out,
                          use_kron=use_kron),
        grid=(N, n_h),
        in_specs=[
            pl.BlockSpec((1, H_pad, W_pad * C_in), lambda n, h: (n, 0, 0)),
            pl.BlockSpec((k * k, WC_in), lambda n, h: (0, 0)),
            wpw_spec,
        ],
        out_specs=(
            pl.BlockSpec((1, TH, WC_out), lambda n, h: (n, h, 0)),
            pl.BlockSpec((1, 1, 2, WC_out), lambda n, h: (n, h, 0, 0)),
        ),
        out_shape=(
            jax.ShapeDtypeStruct((N, H_out, WC_out), _Y_DTYPE),
            jax.ShapeDtypeStruct((N, n_h, 2, WC_out), jnp.float32),
        ),
        compiler_params=pltpu.CompilerParams(
            dimension_semantics=("parallel", "parallel"),
            vmem_limit_bytes=_VMEM_LIMIT),
        cost_estimate=pl.CostEstimate(flops=conv_flops, transcendentals=0,
                                      bytes_accessed=conv_bytes),
    )(x_packed, wdw_packed, wpw_arg)

    # ---- glue: finalize BN statistics (C_out-sized, negligible) --------------
    # One-pass E[y^2]-E[y]^2 in f32 (clamped at 0).
    # TODO(synk): Welford/shifted accumulation if run at very large N*H*W.
    psum = stats[:, :, 0, :].reshape(N, n_h, W_out, C_out).sum(axis=(0, 1, 2))
    psq = stats[:, :, 1, :].reshape(N, n_h, W_out, C_out).sum(axis=(0, 1, 2))
    cnt = float(N * H_out * W_out)
    mean = psum / cnt
    var = jnp.maximum(psq / cnt - mean * mean, 0.0)       # biased, training-mode BN
    inv = lax.rsqrt(var + BN_EPS)
    scale = gamma.astype(jnp.float32) * inv
    shift = beta.astype(jnp.float32) - mean * scale
    scale_row = jnp.tile(scale, W_out).reshape(1, WC_out)
    shift_row = jnp.tile(shift, W_out).reshape(1, WC_out)

    # ---- pass 2: apply normalization in place over y (lane dense, bf16) ------
    out_packed = pl.pallas_call(
        _bn_apply_kernel,
        grid=(N, n_h),
        in_specs=[
            pl.BlockSpec((1, TH, WC_out), lambda n, h: (n, h, 0)),
            pl.BlockSpec((1, WC_out), lambda n, h: (0, 0)),
            pl.BlockSpec((1, WC_out), lambda n, h: (0, 0)),
        ],
        out_specs=pl.BlockSpec((1, TH, WC_out), lambda n, h: (n, h, 0)),
        out_shape=jax.ShapeDtypeStruct((N, H_out, WC_out), _Y_DTYPE),
        input_output_aliases={0: 0},          # write in place over y_packed
        compiler_params=pltpu.CompilerParams(
            dimension_semantics=("parallel", "parallel"),
            vmem_limit_bytes=_VMEM_LIMIT),
        cost_estimate=pl.CostEstimate(
            flops=2 * N * H_out * WC_out, transcendentals=0,
            bytes_accessed=2 * 2 * N * H_out * WC_out + 2 * 4 * WC_out),
    )(y_packed, scale_row, shift_row)

    # ---- glue: unpack to PyTorch NCHW layout, f32 -----------------------------
    out = jnp.transpose(out_packed.reshape(N, H_out, W_out, C_out), (0, 3, 1, 2))
    return out.astype(jnp.float32)


def _reference(x, w_dw, w_pw, gamma, beta, *, stride, padding, dilation):
    C_in = x.shape[1]
    x = jnp.maximum(x, 0.0)
    y = lax.conv_general_dilated(
        x, w_dw, window_strides=(stride, stride),
        padding=[(padding, padding), (padding, padding)],
        rhs_dilation=(dilation, dilation),
        feature_group_count=C_in,
        dimension_numbers=("NCHW", "OIHW", "NCHW"))
    y = lax.conv_general_dilated(
        y, w_pw, window_strides=(1, 1), padding="VALID",
        dimension_numbers=("NCHW", "OIHW", "NCHW"))
    mean = y.mean(axis=(0, 2, 3), keepdims=True)
    var = ((y - mean) ** 2).mean(axis=(0, 2, 3), keepdims=True)
    y = (y - mean) / jnp.sqrt(var + BN_EPS)
    return y * gamma.reshape(1, -1, 1, 1) + beta.reshape(1, -1, 1, 1)


if __name__ == "__main__":
    # DilConv(C_in=4, C_out=8, kernel_size=3, stride=1, padding=2, dilation=2)
    C_in, C_out, K, STRIDE, PAD, DIL = 4, 8, 3, 1, 2, 2
    N, H, W = 2, 16, 16

    key = jax.random.PRNGKey(0)
    kx, kdw, kpw = jax.random.split(key, 3)
    x = jax.random.normal(kx, (N, C_in, H, W), dtype=jnp.float32)
    w_dw = jax.random.normal(kdw, (C_in, 1, K, K), dtype=jnp.float32) * 0.2
    w_pw = jax.random.normal(kpw, (C_out, C_in, 1, 1), dtype=jnp.float32) * 0.2
    gamma = jnp.ones((C_out,), dtype=jnp.float32)   # affine=True init
    beta = jnp.zeros((C_out,), dtype=jnp.float32)

    fwd = jax.jit(functools.partial(dil_conv, stride=STRIDE, padding=PAD,
                                    dilation=DIL))
    out = jax.block_until_ready(fwd(x, w_dw, w_pw, gamma, beta))

    ref = _reference(x, w_dw, w_pw, gamma, beta,
                     stride=STRIDE, padding=PAD, dilation=DIL)
    assert out.shape == (N, C_out, H, W), out.shape
    # Tolerance accounts for the bf16 carry of y / out (stats stay in f32).
    assert jnp.allclose(out, ref, rtol=3e-2, atol=3e-2), \
        float(jnp.abs(out - ref).max())

    print("KERNEL_OK")
</pallas_src>

<mosaic_0001>
module attributes {stable_mosaic.version = 11 : i64} {
  func.func @_conv_stats_kernel(%arg0: i32, %arg1: i32, %arg2: memref<1x20x80xf32, #tpu.memory_space<vmem>>, %arg3: memref<9x64xf32, #tpu.memory_space<vmem>>, %arg4: memref<64x128xf32, #tpu.memory_space<vmem>>, %arg5: memref<1x16x128xbf16, #tpu.memory_space<vmem>>, %arg6: memref<1x1x2x128xf32, #tpu.memory_space<vmem>>) attributes {dimension_semantics = [#tpu.dimension_semantics<parallel>, #tpu.dimension_semantics<parallel>], iteration_bounds = array<i64: 2, 1>, scalar_prefetch = 0 : i64, scratch_operands = 0 : i64, tpu.core_type = #tpu.core_type<tc>, window_params = [{transform_indices = @transform_0, window_bounds = array<i64: 1, 20, 80>}, {pipeline_mode = #tpu.pipeline_mode<synchronous>, transform_indices = @transform_1, window_bounds = array<i64: 9, 64>}, {pipeline_mode = #tpu.pipeline_mode<synchronous>, transform_indices = @transform_2, window_bounds = array<i64: 64, 128>}, {transform_indices = @transform_3, window_bounds = array<i64: 1, 16, 128>}, {transform_indices = @transform_4, window_bounds = array<i64: 1, 1, 2, 128>}]} {
    %c16_i32 = arith.constant 16 : i32
    %0 = arith.muli %arg1, %c16_i32 : i32
    %1 = tpu.assume_multiple %0, 8 : i32
    %c0 = arith.constant 0 : index
    %2 = arith.index_cast %1 : i32 to index
    %c0_0 = arith.constant 0 : index
    %3 = vector.load %arg2[%c0, %2, %c0_0] : memref<1x20x80xf32, #tpu.memory_space<vmem>>, vector<1x20x80xf32>
    %4 = vector.shape_cast %3 : vector<1x20x80xf32> to vector<20x80xf32>
    %cst = arith.constant 0.000000e+00 : f32
    %5 = vector.broadcast %cst : f32 to vector<20x80xf32>
    %6 = arith.maximumf %4, %5 : vector<20x80xf32>
    %c0_1 = arith.constant 0 : index
    %c0_2 = arith.constant 0 : index
    %7 = vector.load %arg3[%c0_1, %c0_2] : memref<9x64xf32, #tpu.memory_space<vmem>>, vector<9x64xf32>
    %8 = vector.extract_strided_slice %6 {offsets = [0, 0], sizes = [16, 80], strides = [1, 1]} : vector<20x80xf32> to vector<16x80xf32>
    %9 = vector.extract_strided_slice %8 {offsets = [0, 0], sizes = [16, 64], strides = [1, 1]} : vector<16x80xf32> to vector<16x64xf32>
    %10 = vector.extract_strided_slice %7 {offsets = [0, 0], sizes = [1, 64], strides = [1, 1]} : vector<9x64xf32> to vector<1x64xf32>
    %11 = vector.broadcast %10 : vector<1x64xf32> to vector<16x64xf32>
    %12 = arith.mulf %9, %11 : vector<16x64xf32>
    %13 = vector.extract_strided_slice %8 {offsets = [0, 8], sizes = [16, 64], strides = [1, 1]} : vector<16x80xf32> to vector<16x64xf32>
    %14 = vector.extract_strided_slice %7 {offsets = [1, 0], sizes = [1, 64], strides = [1, 1]} : vector<9x64xf32> to vector<1x64xf32>
    %15 = vector.broadcast %14 : vector<1x64xf32> to vector<16x64xf32>
    %16 = arith.mulf %13, %15 : vector<16x64xf32>
    %17 = arith.addf %12, %16 : vector<16x64xf32>
    %18 = vector.extract_strided_slice %8 {offsets = [0, 16], sizes = [16, 64], strides = [1, 1]} : vector<16x80xf32> to vector<16x64xf32>
    %19 = vector.extract_strided_slice %7 {offsets = [2, 0], sizes = [1, 64], strides = [1, 1]} : vector<9x64xf32> to vector<1x64xf32>
    %20 = vector.broadcast %19 : vector<1x64xf32> to vector<16x64xf32>
    %21 = arith.mulf %18, %20 : vector<16x64xf32>
    %22 = arith.addf %17, %21 : vector<16x64xf32>
    %23 = vector.extract_strided_slice %6 {offsets = [2, 0], sizes = [16, 80], strides = [1, 1]} : vector<20x80xf32> to vector<16x80xf32>
    %24 = vector.extract_strided_slice %23 {offsets = [0, 0], sizes = [16, 64], strides = [1, 1]} : vector<16x80xf32> to vector<16x64xf32>
    %25 = vector.extract_strided_slice %7 {offsets = [3, 0], sizes = [1, 64], strides = [1, 1]} : vector<9x64xf32> to vector<1x64xf32>
    %26 = vector.broadcast %25 : vector<1x64xf32> to vector<16x64xf32>
    %27 = arith.mulf %24, %26 : vector<16x64xf32>
    %28 = arith.addf %22, %27 : vector<16x64xf32>
    %29 = vector.extract_strided_slice %23 {offsets = [0, 8], sizes = [16, 64], strides = [1, 1]} : vector<16x80xf32> to vector<16x64xf32>
    %30 = vector.extract_strided_slice %7 {offsets = [4, 0], sizes = [1, 64], strides = [1, 1]} : vector<9x64xf32> to vector<1x64xf32>
    %31 = vector.broadcast %30 : vector<1x64xf32> to vector<16x64xf32>
    %32 = arith.mulf %29, %31 : vector<16x64xf32>
    %33 = arith.addf %28, %32 : vector<16x64xf32>
    %34 = vector.extract_strided_slice %23 {offsets = [0, 16], sizes = [16, 64], strides = [1, 1]} : vector<16x80xf32> to vector<16x64xf32>
    %35 = vector.extract_strided_slice %7 {offsets = [5, 0], sizes = [1, 64], strides = [1, 1]} : vector<9x64xf32> to vector<1x64xf32>
    %36 = vector.broadcast %35 : vector<1x64xf32> to vector<16x64xf32>
    %37 = arith.mulf %34, %36 : vector<16x64xf32>
    %38 = arith.addf %33, %37 : vector<16x64xf32>
    %39 = vector.extract_strided_slice %6 {offsets = [4, 0], sizes = [16, 80], strides = [1, 1]} : vector<20x80xf32> to vector<16x80xf32>
    %40 = vector.extract_strided_slice %39 {offsets = [0, 0], sizes = [16, 64], strides = [1, 1]} : vector<16x80xf32> to vector<16x64xf32>
    %41 = vector.extract_strided_slice %7 {offsets = [6, 0], sizes = [1, 64], strides = [1, 1]} : vector<9x64xf32> to vector<1x64xf32>
    %42 = vector.broadcast %41 : vector<1x64xf32> to vector<16x64xf32>
    %43 = arith.mulf %40, %42 : vector<16x64xf32>
    %44 = arith.addf %38, %43 : vector<16x64xf32>
    %45 = vector.extract_strided_slice %39 {offsets = [0, 8], sizes = [16, 64], strides = [1, 1]} : vector<16x80xf32> to vector<16x64xf32>
    %46 = vector.extract_strided_slice %7 {offsets = [7, 0], sizes = [1, 64], strides = [1, 1]} : vector<9x64xf32> to vector<1x64xf32>
    %47 = vector.broadcast %46 : vector<1x64xf32> to vector<16x64xf32>
    %48 = arith.mulf %45, %47 : vector<16x64xf32>
    %49 = arith.addf %44, %48 : vector<16x64xf32>
    %50 = vector.extract_strided_slice %39 {offsets = [0, 16], sizes = [16, 64], strides = [1, 1]} : vector<16x80xf32> to vector<16x64xf32>
    %51 = vector.extract_strided_slice %7 {offsets = [8, 0], sizes = [1, 64], strides = [1, 1]} : vector<9x64xf32> to vector<1x64xf32>
    %52 = vector.broadcast %51 : vector<1x64xf32> to vector<16x64xf32>
    %53 = arith.mulf %50, %52 : vector<16x64xf32>
    %54 = arith.addf %49, %53 : vector<16x64xf32>
    %c0_3 = arith.constant 0 : index
    %c0_4 = arith.constant 0 : index
    %55 = vector.load %arg4[%c0_3, %c0_4] : memref<64x128xf32, #tpu.memory_space<vmem>>, vector<64x128xf32>
    %cst_5 = arith.constant dense<0.000000e+00> : vector<16x128xf32>
    %56 = tpu.matmul %54, %55, %cst_5 {dimension_numbers = #tpu.dot_dimension_numbers<[1], [0], [0], [1], [0, 0, 1, 1], [], []>} : vector<16x64xf32>, vector<64x128xf32>, vector<16x128xf32> -> vector<16x128xf32>
    %cst_6 = arith.constant dense<0.000000e+00> : vector<128xf32>
    %57 = vector.multi_reduction <add>, %56, %cst_6 [0] : vector<16x128xf32> to vector<128xf32>
    %58 = vector.shape_cast %57 : vector<128xf32> to vector<1x128xf32>
    %59 = arith.mulf %56, %56 : vector<16x128xf32>
    %cst_7 = arith.constant dense<0.000000e+00> : vector<128xf32>
    %60 = vector.multi_reduction <add>, %59, %cst_7 [0] : vector<16x128xf32> to vector<128xf32>
    %61 = vector.shape_cast %60 : vector<128xf32> to vector<1x128xf32>
    %62 = tpu.iota {dimensions = array<i32: 0>} : vector<2x128xi32>
    %c0_i32 = arith.constant 0 : i32
    %63 = vector.broadcast %c0_i32 : i32 to vector<2x128xi32>
    %64 = arith.cmpi eq, %62, %63 : vector<2x128xi32>
    %65 = vector.shape_cast %58 : vector<1x128xf32> to vector<1x128xf32>
    %66 = vector.broadcast %65 : vector<1x128xf32> to vector<2x128xf32>
    %67 = vector.shape_cast %61 : vector<1x128xf32> to vector<1x128xf32>
    %68 = vector.broadcast %67 : vector<1x128xf32> to vector<2x128xf32>
    %69 = arith.select %64, %66, %68 : vector<2x128xi1>, vector<2x128xf32>
    %c0_8 = arith.constant 0 : index
    %c0_9 = arith.constant 0 : index
    %c0_10 = arith.constant 0 : index
    %c0_11 = arith.constant 0 : index
    %70 = vector.load %arg6[%c0_8, %c0_9, %c0_10, %c0_11] : memref<1x1x2x128xf32, #tpu.memory_space<vmem>>, vector<1x1x2x128xf32>
    %71 = vector.shape_cast %70 : vector<1x1x2x128xf32> to vector<2x128xf32>
    %72 = vector.shape_cast %69 : vector<2x128xf32> to vector<1x1x2x128xf32>
    tpu.vector_store %arg6[%c0_8, %c0_9, %c0_10, %c0_11], %72 {strides = array<i32>} : memref<1x1x2x128xf32, #tpu.memory_space<vmem>>, vector<1x1x2x128xf32>,
    %73 = arith.truncf %56 : vector<16x128xf32> to vector<16x128xbf16>
    %c0_12 = arith.constant 0 : index
    %c0_13 = arith.constant 0 : index
    %c0_14 = arith.constant 0 : index
    %74 = vector.load %arg5[%c0_12, %c0_13, %c0_14] : memref<1x16x128xbf16, #tpu.memory_space<vmem>>, vector<1x16x128xbf16>
    %75 = vector.shape_cast %74 : vector<1x16x128xbf16> to vector<16x128xbf16>
    %76 = vector.shape_cast %73 : vector<16x128xbf16> to vector<1x16x128xbf16>
    tpu.vector_store %arg5[%c0_12, %c0_13, %c0_14], %76 {strides = array<i32>} : memref<1x16x128xbf16, #tpu.memory_space<vmem>>, vector<1x16x128xbf16>,
    return
  }
  func.func @transform_0(%arg0: i32, %arg1: i32) -> (i32, i32, i32) {
    %c0_i32 = arith.constant 0 : i32
    %c0_i32_0 = arith.constant 0 : i32
    %c0_i32_1 = arith.constant 0 : i32
    return %arg0, %c0_i32, %c0_i32_0 : i32, i32, i32
  }
  func.func @transform_1(%arg0: i32, %arg1: i32) -> (i32, i32) {
    %c0_i32 = arith.constant 0 : i32
    %c0_i32_0 = arith.constant 0 : i32
    %c0_i32_1 = arith.constant 0 : i32
    return %c0_i32, %c0_i32_0 : i32, i32
  }
  func.func @transform_2(%arg0: i32, %arg1: i32) -> (i32, i32) {
    %c0_i32 = arith.constant 0 : i32
    %c0_i32_0 = arith.constant 0 : i32
    %c0_i32_1 = arith.constant 0 : i32
    return %c0_i32, %c0_i32_0 : i32, i32
  }
  func.func @transform_3(%arg0: i32, %arg1: i32) -> (i32, i32, i32) {
    %c0_i32 = arith.constant 0 : i32
    %c0_i32_0 = arith.constant 0 : i32
    return %arg0, %arg1, %c0_i32 : i32, i32, i32
  }
  func.func @transform_4(%arg0: i32, %arg1: i32) -> (i32, i32, i32, i32) {
    %c0_i32 = arith.constant 0 : i32
    %c0_i32_0 = arith.constant 0 : i32
    %c0_i32_1 = arith.constant 0 : i32
    return %arg0, %arg1, %c0_i32, %c0_i32_0 : i32, i32, i32, i32
  }
}

module attributes {stable_mosaic.version = 11 : i64} {
  func.func @_bn_apply_kernel(%arg0: i32, %arg1: i32, %arg2: memref<1x16x128xbf16, #tpu.memory_space<vmem>>, %arg3: memref<1x128xf32, #tpu.memory_space<vmem>>, %arg4: memref<1x128xf32, #tpu.memory_space<vmem>>, %arg5: memref<1x16x128xbf16, #tpu.memory_space<vmem>>) attributes {dimension_semantics = [#tpu.dimension_semantics<parallel>, #tpu.dimension_semantics<parallel>], iteration_bounds = array<i64: 2, 1>, scalar_prefetch = 0 : i64, scratch_operands = 0 : i64, tpu.core_type = #tpu.core_type<tc>, window_params = [{transform_indices = @transform_0, window_bounds = array<i64: 1, 16, 128>}, {pipeline_mode = #tpu.pipeline_mode<synchronous>, transform_indices = @transform_1, window_bounds = array<i64: 1, 128>}, {pipeline_mode = #tpu.pipeline_mode<synchronous>, transform_indices = @transform_2, window_bounds = array<i64: 1, 128>}, {transform_indices = @transform_3, window_bounds = array<i64: 1, 16, 128>}]} {
    %c0 = arith.constant 0 : index
    %c0_0 = arith.constant 0 : index
    %c0_1 = arith.constant 0 : index
    %0 = vector.load %arg2[%c0, %c0_0, %c0_1] : memref<1x16x128xbf16, #tpu.memory_space<vmem>>, vector<1x16x128xbf16>
    %1 = vector.shape_cast %0 : vector<1x16x128xbf16> to vector<16x128xbf16>
    %2 = arith.extf %1 : vector<16x128xbf16> to vector<16x128xf32>
    %c0_2 = arith.constant 0 : index
    %c0_3 = arith.constant 0 : index
    %3 = vector.load %arg3[%c0_2, %c0_3] : memref<1x128xf32, #tpu.memory_space<vmem>>, vector<1x128xf32>
    %4 = vector.broadcast %3 : vector<1x128xf32> to vector<16x128xf32>
    %5 = arith.mulf %2, %4 : vector<16x128xf32>
    %c0_4 = arith.constant 0 : index
    %c0_5 = arith.constant 0 : index
    %6 = vector.load %arg4[%c0_4, %c0_5] : memref<1x128xf32, #tpu.memory_space<vmem>>, vector<1x128xf32>
    %7 = vector.broadcast %6 : vector<1x128xf32> to vector<16x128xf32>
    %8 = arith.addf %5, %7 : vector<16x128xf32>
    %9 = arith.truncf %8 : vector<16x128xf32> to vector<16x128xbf16>
    %c0_6 = arith.constant 0 : index
    %c0_7 = arith.constant 0 : index
    %c0_8 = arith.constant 0 : index
    %10 = vector.load %arg5[%c0_6, %c0_7, %c0_8] : memref<1x16x128xbf16, #tpu.memory_space<vmem>>, vector<1x16x128xbf16>
    %11 = vector.shape_cast %10 : vector<1x16x128xbf16> to vector<16x128xbf16>
    %12 = vector.shape_cast %9 : vector<16x128xbf16> to vector<1x16x128xbf16>
    tpu.vector_store %arg5[%c0_6, %c0_7, %c0_8], %12 {strides = array<i32>} : memref<1x16x128xbf16, #tpu.memory_space<vmem>>, vector<1x16x128xbf16>,
    return
  }
  func.func @transform_0(%arg0: i32, %arg1: i32) -> (i32, i32, i32) {
    %c0_i32 = arith.constant 0 : i32
    %c0_i32_0 = arith.constant 0 : i32
    return %arg0, %arg1, %c0_i32 : i32, i32, i32
  }
  func.func @transform_1(%arg0: i32, %arg1: i32) -> (i32, i32) {
    %c0_i32 = arith.constant 0 : i32
    %c0_i32_0 = arith.constant 0 : i32
    %c0_i32_1 = arith.constant 0 : i32
    return %c0_i32, %c0_i32_0 : i32, i32
  }
  func.func @transform_2(%arg0: i32, %arg1: i32) -> (i32, i32) {
    %c0_i32 = arith.constant 0 : i32
    %c0_i32_0 = arith.constant 0 : i32
    %c0_i32_1 = arith.constant 0 : i32
    return %c0_i32, %c0_i32_0 : i32, i32
  }
  func.func @transform_3(%arg0: i32, %arg1: i32) -> (i32, i32, i32) {
    %c0_i32 = arith.constant 0 : i32
    %c0_i32_0 = arith.constant 0 : i32
    return %arg0, %arg1, %c0_i32 : i32, i32, i32
  }
}

</mosaic_0001>

<llo_original>
// kernel: tile.21
$region0: #{tile.21}
  #allocation0 [shape = 's32[1]{0}', space=sflag, size = 0x4, scoped, tag = 'scoped memory for tile.21']
  %s0 = inlined_call_operand.vmem [shape: f32[8], index: 0, kind: input, shape index: {}]
  %s1 = inlined_call_operand.vmem [shape: f32[16,8], index: 1, kind: output, shape index: {}]
  // Predicated region
  $region2: #{tile.21} parent=0 // pred_check
    _
  $region3: #{tile.21} parent=0 // pred_check_branch
    %3 = sbr.rel (0) target = $region5
  $region4: #{tile.21} parent=0 // pred_region
    _
  $region5: #{tile.21} parent=0 // pred_fallthru
    _
  %v4 = vld [vmem:[%s0] ss:$0 sm:$0xff]
  %5 = vst [vmem:[%s1] sm:$0xff] %v4
  %s6 = scalar_lea.vmem %s1, 8
  %7 = vst [vmem:[%s6] sm:$0xff] %v4

// kernel: tile.22
$region0: #{tile.22}
  %s0 = inlined_call_operand.vmem [shape: f32[16,8], index: 0, kind: input, shape index: {}]
  %s1 = inlined_call_operand.vmem [shape: f32[1,128], index: 1, kind: output, shape index: {}]
  $region1: #{tile.22} parent=0
    #allocation0 [shape = 'u8[4096]{0}', space=vmem, size = 0x1000, scoped, tag = 'scoped mem for output reshape']
    %v2 = vld [vmem:[%s0] sm:$0x1]
    %vm3 = vcmask 64512
    %4 = vst.msk [vmem:[#allocation0] sm:$0x1] %vm3, %v2
    %s5 = scalar_lea.vmem %s0, 15
    %v6 = vld [vmem:[%s5] sm:$0x1]
    %7 = vrot.lane.b32.xlu0 %v6, 120
    %v8 = vpop.permute.xlu0 %7
    %vm9 = vcmask 1048512
    %10 = vst.msk [vmem:[#allocation0] sm:$0x1] %vm9, %v8
    %s11 = scalar_lea.vmem %s0, 14
    %v12 = vld [vmem:[%s11] sm:$0x1]
    %13 = vrot.lane.b32.xlu0 %v12, 112
    %v14 = vpop.permute.xlu0 %13
    %vm15 = vcmask 982912
    %16 = vst.msk [vmem:[#allocation0] sm:$0x1] %vm15, %v14
    %s17 = scalar_lea.vmem %s0, 13
    %v18 = vld [vmem:[%s17] sm:$0x1]
    %19 = vrot.lane.b32.xlu0 %v18, 104
    %v20 = vpop.permute.xlu0 %19
    %vm21 = vcmask 917312
    %22 = vst.msk [vmem:[#allocation0] sm:$0x1] %vm21, %v20
    %s23 = scalar_lea.vmem %s0, 12
    %v24 = vld [vmem:[%s23] sm:$0x1]
    %25 = vrot.lane.b32.xlu0 %v24, 96
    %v26 = vpop.permute.xlu0 %25
    %vm27 = vcmask 851712
    %28 = vst.msk [vmem:[#allocation0] sm:$0x1] %vm27, %v26
    %s29 = scalar_lea.vmem %s0, 11
    %v30 = vld [vmem:[%s29] sm:$0x1]
    %31 = vrot.lane.b32.xlu0 %v30, 88
    %v32 = vpop.permute.xlu0 %31
    %vm33 = vcmask 786112
    %34 = vst.msk [vmem:[#allocation0] sm:$0x1] %vm33, %v32
    %s35 = scalar_lea.vmem %s0, 10
    %v36 = vld [vmem:[%s35] sm:$0x1]
    %37 = vrot.lane.b32.xlu0 %v36, 80
    %v38 = vpop.permute.xlu0 %37
    %vm39 = vcmask 720512
    %40 = vst.msk [vmem:[#allocation0] sm:$0x1] %vm39, %v38
    %s41 = scalar_lea.vmem %s0, 9
    %v42 = vld [vmem:[%s41] sm:$0x1]
    %43 = vrot.lane.b32.xlu0 %v42, 72
    %v44 = vpop.permute.xlu0 %43
    %vm45 = vcmask 654912
    %46 = vst.msk [vmem:[#allocation0] sm:$0x1] %vm45, %v44
    %s47 = scalar_lea.vmem %s0, 8
    %v48 = vld [vmem:[%s47] sm:$0x1]
    %49 = vrot.lane.b32.xlu0 %v48, 64
    %v50 = vpop.permute.xlu0 %49
    %vm51 = vcmask 589312
    %52 = vst.msk [vmem:[#allocation0] sm:$0x1] %vm51, %v50
    %s53 = scalar_lea.vmem %s0, 7
    %v54 = vld [vmem:[%s53] sm:$0x1]
    %55 = vrot.lane.b32.xlu0 %v54, 56
    %v56 = vpop.permute.xlu0 %55
    %vm57 = vcmask 523712
    %58 = vst.msk [vmem:[#allocation0] sm:$0x1] %vm57, %v56
    %s59 = scalar_lea.vmem %s0, 6
    %v60 = vld [vmem:[%s59] sm:$0x1]
    %61 = vrot.lane.b32.xlu0 %v60, 48
    %v62 = vpop.permute.xlu0 %61
    %vm63 = vcmask 458112
    %64 = vst.msk [vmem:[#allocation0] sm:$0x1] %vm63, %v62
    %s65 = scalar_lea.vmem %s0, 5
    %v66 = vld [vmem:[%s65] sm:$0x1]
    %67 = vrot.lane.b32.xlu0 %v66, 40
    %v68 = vpop.permute.xlu0 %67
    %vm69 = vcmask 392512
    %70 = vst.msk [vmem:[#allocation0] sm:$0x1] %vm69, %v68
    %s71 = scalar_lea.vmem %s0, 4
    %v72 = vld [vmem:[%s71] sm:$0x1]
    %73 = vrot.lane.b32.xlu0 %v72, 32
    %v74 = vpop.permute.xlu0 %73
    %vm75 = vcmask 326912
    %76 = vst.msk [vmem:[#allocation0] sm:$0x1] %vm75, %v74
    %s77 = scalar_lea.vmem %s0, 3
    %v78 = vld [vmem:[%s77] sm:$0x1]
    %79 = vrot.lane.b32.xlu0 %v78, 24
    %v80 = vpop.permute.xlu0 %79
    %vm81 = vcmask 261312
    %82 = vst.msk [vmem:[#allocation0] sm:$0x1] %vm81, %v80
    %s83 = scalar_lea.vmem %s0, 2
    %v84 = vld [vmem:[%s83] sm:$0x1]
    %85 = vrot.lane.b32.xlu0 %v84, 16
    %v86 = vpop.permute.xlu0 %85
    %vm87 = vcmask 195712
    %88 = vst.msk [vmem:[#allocation0] sm:$0x1] %vm87, %v86
    %s89 = scalar_lea.vmem %s0, 1
    %v90 = vld [vmem:[%s89] sm:$0x1]
    %91 = vrot.lane.b32.xlu0 %v90, 8
    %v92 = vpop.permute.xlu0 %91
    %vm93 = vcmask 130112
    %94 = vst.msk [vmem:[#allocation0] sm:$0x1] %vm93, %v92
    %s96 = sshllo.u32 0, 1
    %v98 = vld [vmem:[#allocation0] sm:%s96]
    %s99 = sshllo.u32 0, 1
    %100 = vst [vmem:[%s1] sm:%s99] %v98

// kernel: dil_conv.3
$region0: #{dil_conv.3}
  #allocation0 [shape = 'u32[]', space=smem, size = 0x4, offset = 0x4, fixed_abs, tag = 'smem constant byte address 0x4 - core index']
  #allocation1 [shape = 'u32[144,128]{1,0:T(1,128)}', space=vmem, size = 0x12000, scoped, tag = 'internal scratch']
  %s0 = inlined_call_operand.vmem [shape: bf16[2,16,128], index: 0, kind: input, shape index: {}, may-alias: {0,3}]
  %s1 = inlined_call_operand.vmem [shape: f32[1,128], index: 1, kind: input, shape index: {}]
  %s2 = inlined_call_operand.vmem [shape: f32[1,128], index: 2, kind: input, shape index: {}]
  %s3 = inlined_call_operand.vmem [shape: bf16[2,16,128], index: 3, kind: output, shape index: {}, may-alias: {0,3}]
  %s4 = sld [smem:[#allocation0]]
  $region45: #{dil_conv.3} parent=0
    _
  %s6 = ssub.s32 1, %s4
  %s7 = scalar_select 0, %s6, %s4
  loop: start=0, step=1, limit=4
  $region2: #{dil_conv.3} parent=0 // loop_pre_header
    _
  $region3: #{dil_conv.3} parent=0 // loop_header
    %s9 = sphi 0, %s13
    %p10 = scmp.ge.s32.totalorder %s9, 4
    %s16 = sphi 0, %s28
    %s17 = sphi 0, %s24
    %s18 = sphi 0, %s16
    %s19 = sphi 0, %s17
    %s20 = sphi 0, %s18
    %s21 = sphi 0, %s19
    %s33 = sphi 0, %s35
    %s36 = sphi 0, %s33
    %s37 = sphi 0, %s36
    %s53 = sphi 0, %s37
    %s57 = sphi 0, %s57
    %s59 = sphi 0, %s57
    %s60 = sphi 0, %s59
    %s74 = sphi 0, %s60
    %s78 = sphi 0, %s78
    %s80 = sphi 0, %s78
    %s81 = sphi 0, %s80
    %s95 = sphi 0, %s81
    %s103 = sphi 0, %s105
    %s106 = sphi 0, %s103
    %s107 = sphi 0, %s106
    %s123 = sphi 0, %s107
  $region4: #{dil_conv.3} parent=0 // loop_header_branch
    %12 = sbr.rel (%p10) target = $region8
  $region5: #{dil_conv.3} parent=0 // loop_body
    %s14 = ssub.s32 %s9, 1
    %s15 = ssub.s32 %s9, 2
    %s22 = sadd.s32 1, %s17
    %p23 = scmp.ge.s32.totalorder %s22, 1
    %s24 = scalar_select %p23, 0, %s22
    %s25 = sadd.s32 1, %s16
    %s26 = scalar_select %p23, %s25, %s16
    %p27 = scmp.ge.s32.totalorder %s26, 2
    %s28 = scalar_select %p27, 0, %s26
    %s29 = ssub.s32 %s16, %s28
    %s30 = ssub.s32 %s17, %s24
    %s31 = sor.u32 %s29, %s30
    %p32 = scmp.eq.s32.totalorder %s31, 0
    %s34 = sadd.s32 %s33, 1
    %s35 = scalar_select %p32, %s33, %s34
    %p38 = pneg %p32
    %p39 = scmp.eq.s32.totalorder %s9, 1
    %p40 = por %p38, %p39
    %p41 = scmp.ne.s32.totalorder %s33, %s36
    %p42 = scmp.eq.s32.totalorder %s9, 0
    %p43 = por %p41, %p42
    %p44 = scmp.ne.s32.totalorder %s33, %s36
    %p45 = scmp.eq.s32.totalorder %s14, 1
    %p46 = por %p44, %p45
    %p47 = scmp.ne.s32.totalorder %s36, %s37
    %p48 = scmp.eq.s32.totalorder %s14, 0
    %p49 = por %p47, %p48
    %p50 = scmp.ne.s32.totalorder %s36, %s37
    %p51 = scmp.eq.s32.totalorder %s15, 1
    %p52 = por %p50, %p51
    %p54 = scmp.ne.s32.totalorder %s37, %s53
    %p55 = scmp.eq.s32.totalorder %s15, 0
    %p56 = por %p54, %p55
    %s58 = sadd.s32 %s57, 1
    %p61 = scmp.eq.s32.totalorder %s9, 1
    %p62 = scmp.ne.s32.totalorder %s57, %s59
    %p63 = scmp.eq.s32.totalorder %s9, 0
    %p64 = por %p62, %p63
    %p65 = scmp.ne.s32.totalorder %s57, %s59
    %p66 = scmp.eq.s32.totalorder %s14, 1
    %p67 = por %p65, %p66
    %p68 = scmp.ne.s32.totalorder %s59, %s60
    %p69 = scmp.eq.s32.totalorder %s14, 0
    %p70 = por %p68, %p69
    %p71 = scmp.ne.s32.totalorder %s59, %s60
    %p72 = scmp.eq.s32.totalorder %s15, 1
    %p73 = por %p71, %p72
    %p75 = scmp.ne.s32.totalorder %s60, %s74
    %p76 = scmp.eq.s32.totalorder %s15, 0
    %p77 = por %p75, %p76
    %s79 = sadd.s32 %s78, 1
    %p82 = scmp.eq.s32.totalorder %s9, 1
    %p83 = scmp.ne.s32.totalorder %s78, %s80
    %p84 = scmp.eq.s32.totalorder %s9, 0
    %p85 = por %p83, %p84
    %p86 = scmp.ne.s32.totalorder %s78, %s80
    %p87 = scmp.eq.s32.totalorder %s14, 1
    %p88 = por %p86, %p87
    %p89 = scmp.ne.s32.totalorder %s80, %s81
    %p90 = scmp.eq.s32.totalorder %s14, 0
    %p91 = por %p89, %p90
    %p92 = scmp.ne.s32.totalorder %s80, %s81
    %p93 = scmp.eq.s32.totalorder %s15, 1
    %p94 = por %p92, %p93
    %p96 = scmp.ne.s32.totalorder %s81, %s95
    %p97 = scmp.eq.s32.totalorder %s15, 0
    %p98 = por %p96, %p97
    %s99 = ssub.s32 %s16, %s28
    %s100 = ssub.s32 %s17, %s24
    %s101 = sor.u32 %s99, %s100
    %p102 = scmp.eq.s32.totalorder %s101, 0
    %s104 = sadd.s32 %s103, 1
    %s105 = scalar_select %p102, %s103, %s104
    %p108 = pneg %p102
    %p109 = scmp.eq.s32.totalorder %s9, 1
    %p110 = por %p108, %p109
    %p111 = scmp.ne.s32.totalorder %s103, %s106
    %p112 = scmp.eq.s32.totalorder %s9, 0
    %p113 = por %p111, %p112
    %p114 = scmp.ne.s32.totalorder %s103, %s106
    %p115 = scmp.eq.s32.totalorder %s14, 1
    %p116 = por %p114, %p115
    %p117 = scmp.ne.s32.totalorder %s106, %s107
    %p118 = scmp.eq.s32.totalorder %s14, 0
    %p119 = por %p117, %p118
    %p120 = scmp.ne.s32.totalorder %s106, %s107
    %p121 = scmp.eq.s32.totalorder %s15, 1
    %p122 = por %p120, %p121
    %p124 = scmp.ne.s32.totalorder %s107, %s123
    %p125 = scmp.eq.s32.totalorder %s15, 0
    %p126 = por %p124, %p125
    %p127 = scmp.le.s32.totalorder 1, %s9
    %p128 = scmp.lt.s32.totalorder %s9, 3
    %p129 = pnand %p127, %p128
    %p130 = pneg %p129
    // Predicated region
    $region9: #{dil_conv.3} parent=5 // pred_check
      _
    $region10: #{dil_conv.3} parent=5 // pred_check_branch
      %132 = sbr.rel (%p129) target = $region12
    $region11: #{dil_conv.3} parent=5 // pred_region
      %s133 = ssub.s32 %s9, 1
      // Predicated region
      $region13: #{dil_conv.3} parent=11 // pred_check
        %p134 = pneg %p70
      $region14: #{dil_conv.3} parent=11 // pred_check_branch
        %136 = sbr.rel (%p134) target = $region16
      $region15: #{dil_conv.3} parent=11 // pred_region
        _
      $region16: #{dil_conv.3} parent=11 // pred_fallthru
        _
      // Predicated region
      $region17: #{dil_conv.3} parent=11 // pred_check
        %p137 = pneg %p91
      $region18: #{dil_conv.3} parent=11 // pred_check_branch
        %139 = sbr.rel (%p137) target = $region20
      $region19: #{dil_conv.3} parent=11 // pred_region
        _
      $region20: #{dil_conv.3} parent=11 // pred_fallthru
        _
    $region12: #{dil_conv.3} parent=5 // pred_fallthru
      _
    %p140 = scmp.lt.s32.totalorder %s9, 2
    // Predicated region
    $region21: #{dil_conv.3} parent=5 // pred_check
      %p141 = pneg %p140
    $region22: #{dil_conv.3} parent=5 // pred_check_branch
      %143 = sbr.rel (%p141) target = $region24
    $region23: #{dil_conv.3} parent=5 // pred_region
      // Predicated region
      $region25: #{dil_conv.3} parent=23 // pred_check
        %p144 = pneg %p43
      $region26: #{dil_conv.3} parent=23 // pred_check_branch
        %146 = sbr.rel (%p144) target = $region28
      $region27: #{dil_conv.3} parent=23 // pred_region
        %s147 = smul.u32 2, %s17
        %p148 = scmp.lt.s32.totalorder %s16, 1
        %s149 = scalar_select %p148, %s16, 1
        %p150 = scmp.lt.s32.totalorder %s147, 1
        %s151 = scalar_select %p150, %s147, 1
        %s152 = smul.addr %s149, 2
        %s153 = sadd.s32 %s151, %s152
        %s154 = smul.addr %s153, 4
        %s155 = scalar_lea.vmem %s0, %s154
        %s156 = smul.u32 2, %s17
      $region28: #{dil_conv.3} parent=23 // pred_fallthru
        _
    $region24: #{dil_conv.3} parent=5 // pred_fallthru
      _
    %p157 = scmp.le.s32.totalorder 1, %s9
    %p158 = scmp.lt.s32.totalorder %s9, 3
    %p159 = pnand %p157, %p158
    %p160 = pneg %p159
    // Predicated region
    $region29: #{dil_conv.3} parent=5 // pred_check
      _
    $region30: #{dil_conv.3} parent=5 // pred_check_branch
      %162 = sbr.rel (%p159) target = $region32
    $region31: #{dil_conv.3} parent=5 // pred_region
      %s163 = ssub.s32 %s9, 1
      %s164 = smul.u32 2, %s19
      %p165 = scmp.lt.s32.totalorder %s18, 1
      %s166 = scalar_select %p165, %s18, 1
      %p167 = scmp.lt.s32.totalorder %s164, 1
      %s168 = scalar_select %p167, %s164, 1
      %s169 = smul.addr %s166, 2
      %s170 = sadd.s32 %s168, %s169
      %s171 = smul.addr %s170, 4
      %s172 = scalar_lea.vmem %s0, %s171
      %p173 = pneg %p49
      %p174 = pneg %p46
      %p175 = pneg %p70
      %p176 = pneg %p67
      %p177 = pneg %p91
      %p178 = pneg %p88
      %p179 = pneg %p119
      %p180 = pneg %p116
      %s181 = smul.u32 2, %s19
      %p182 = scmp.lt.s32.totalorder %s18, 1
      %s183 = scalar_select %p182, %s18, 1
      %p184 = scmp.lt.s32.totalorder %s181, 1
      %s185 = scalar_select %p184, %s181, 1
      %s186 = smul.addr %s183, 2
      %s187 = sadd.s32 %s185, %s186
      %s188 = smul.addr %s187, 4
      %s189 = scalar_lea.vmem %s3, %s188
      %s190 = smul.u32 2, %s19
      %p191 = scmp.lt.s32.totalorder %s18, 1
      %s192 = scalar_select %p191, %s18, 1
      %p193 = scmp.lt.s32.totalorder %s190, 1
      %s194 = scalar_select %p193, %s190, 1
      %s195 = smul.addr %s192, 2
      %s196 = sadd.s32 %s194, %s195
      %s197 = smul.addr %s196, 4
      %s198 = scalar_lea.vmem %s0, %s197
      %s199 = smul.u32 2, %s19
      %s200 = smul.u32 2, %s19
      %p201 = scmp.lt.s32.totalorder %s18, 1
      %s202 = scalar_select %p201, %s18, 1
      %p203 = scmp.lt.s32.totalorder %s200, 1
      %s204 = scalar_select %p203, %s200, 1
      %s205 = smul.addr %s202, 2
      %s206 = sadd.s32 %s204, %s205
      %s207 = smul.addr %s206, 4
      %s208 = scalar_lea.vmem %s3, %s207
      %s209 = smul.u32 2, %s19
      %v210 = vld [vmem:[%s198] sm:$0xf]
      %v211 = vld [vmem:[%s198 + $0x4] sm:$0xf]
      %v212 = vunpack.c.l.bf16 %v210
      %v213 = vunpack.c.l.bf16 %v211
      %v214 = vld [vmem:[%s1] sm:$0x1]
      %v216 = vlaneseq
      %v217 = vshrl.u32 %v216, 7
      %v218 = vsub.s32 0, %v217
      %v219 = vrot.slane %v214, %v218
      %v221 = vmul.f32 %v212, %v219
      %v222 = vmul.f32 %v213, %v219
      %v223 = vld [vmem:[%s2] sm:$0x1]
      %v225 = vlaneseq
      %v226 = vshrl.u32 %v225, 7
      %v227 = vsub.s32 0, %v226
      %v228 = vrot.slane %v223, %v227
      %v230 = vadd.f32 %v221, %v228
      %v231 = vadd.f32 %v222, %v228
      %v232 = vpack.c.bf16 %v231, %v230
      %v234 = vunpack.c.l.b16 %v232
      %v235 = vunpack.c.h.b16 %v232
      %v236 = vpack.c.b16 %v234, %v234
      %v237 = vpack.c.b16 %v235, %v235
      %240 = vst [vmem:[%s208] sm:$0xf] %v236
      %241 = vst [vmem:[%s208 + $0x4] sm:$0xf] %v237
      %s242 = smul.u32 2, %s19
      %p243 = scmp.lt.s32.totalorder %s18, 1
      %s244 = scalar_select %p243, %s18, 1
      %p245 = scmp.lt.s32.totalorder %s242, 1
      %s246 = scalar_select %p245, %s242, 1
      %s247 = smul.addr %s244, 2
      %s248 = sadd.s32 %s246, %s247
      %s249 = smul.addr %s248, 4
      %s250 = scalar_lea.vmem %s3, %s249
      // Predicated region
      $region33: #{dil_conv.3} parent=31 // pred_check
        %p251 = pneg %p116
      $region34: #{dil_conv.3} parent=31 // pred_check_branch
        %253 = sbr.rel (%p251) target = $region36
      $region35: #{dil_conv.3} parent=31 // pred_region
        %s254 = smul.u32 2, %s19
      $region36: #{dil_conv.3} parent=31 // pred_fallthru
        _
    $region32: #{dil_conv.3} parent=5 // pred_fallthru
      _
    %p255 = scmp.le.s32.totalorder 2, %s9
    // Predicated region
    $region37: #{dil_conv.3} parent=5 // pred_check
      %p256 = pneg %p255
    $region38: #{dil_conv.3} parent=5 // pred_check_branch
      %258 = sbr.rel (%p256) target = $region40
    $region39: #{dil_conv.3} parent=5 // pred_region
      %s259 = ssub.s32 %s9, 2
      // Predicated region
      $region41: #{dil_conv.3} parent=39 // pred_check
        %p260 = pneg %p122
      $region42: #{dil_conv.3} parent=39 // pred_check_branch
        %262 = sbr.rel (%p260) target = $region44
      $region43: #{dil_conv.3} parent=39 // pred_region
        %s263 = smul.u32 2, %s21
        %p264 = scmp.lt.s32.totalorder %s20, 1
        %s265 = scalar_select %p264, %s20, 1
        %p266 = scmp.lt.s32.totalorder %s263, 1
        %s267 = scalar_select %p266, %s263, 1
        %s268 = smul.addr %s265, 2
        %s269 = sadd.s32 %s267, %s268
        %s270 = smul.addr %s269, 4
        %s271 = scalar_lea.vmem %s3, %s270
      $region44: #{dil_conv.3} parent=39 // pred_fallthru
        _
    $region40: #{dil_conv.3} parent=5 // pred_fallthru
      _
  $region6: #{dil_conv.3} parent=0 // loop_footer
    %s13 = sadd.s32 1, %s9
  $region7: #{dil_conv.3} parent=0 // loop_footer_branch
    %8 = sbr.rel target = $region3
  $region8: #{dil_conv.3} parent=0 // loop_exit
    _

// kernel: dil_conv.2
$region0: #{dil_conv.2}
  #allocation0 [shape = 'u32[]', space=smem, size = 0x4, offset = 0x4, fixed_abs, tag = 'smem constant byte address 0x4 - core index']
  #allocation1 [shape = 'u32[144,128]{1,0:T(1,128)}', space=vmem, size = 0x12000, scoped, tag = 'internal scratch']
  %s0 = inlined_call_operand.vmem [shape: f32[2,20,80], index: 0, kind: input, shape index: {}]
  %s1 = inlined_call_operand.vmem [shape: f32[9,64], index: 1, kind: input, shape index: {}]
  %s2 = inlined_call_operand.vmem [shape: f32[64,128], index: 2, kind: input, shape index: {}]
  %s3 = inlined_call_operand.vmem [shape: bf16[2,16,128], index: 3, kind: output, shape index: {0}]
  %s4 = inlined_call_operand.vmem [shape: f32[2,1,2,128], index: 4, kind: output, shape index: {1}]
  %5 = xla_tuple %s3, %s4
  %s6 = sld [smem:[#allocation0]]
  $region53: #{dil_conv.2} parent=0
    _
  %s8 = ssub.s32 1, %s6
  %s9 = scalar_select 0, %s8, %s6
  loop: start=0, step=1, limit=4
  $region2: #{dil_conv.2} parent=0 // loop_pre_header
    _
  $region3: #{dil_conv.2} parent=0 // loop_header
    %s11 = sphi 0, %s15
    %p12 = scmp.ge.s32.totalorder %s11, 4
    %s18 = sphi 0, %s30
    %s19 = sphi 0, %s26
    %s20 = sphi 0, %s18
    %s21 = sphi 0, %s19
    %s22 = sphi 0, %s20
    %s23 = sphi 0, %s21
    %s33 = sphi 0, %s35
    %s36 = sphi 0, %s33
    %s37 = sphi 0, %s36
    %s53 = sphi 0, %s37
    %s57 = sphi 0, %s57
    %s59 = sphi 0, %s57
    %s60 = sphi 0, %s59
    %s74 = sphi 0, %s60
    %s78 = sphi 0, %s78
    %s80 = sphi 0, %s78
    %s81 = sphi 0, %s80
    %s95 = sphi 0, %s81
    %s103 = sphi 0, %s105
    %s106 = sphi 0, %s103
    %s107 = sphi 0, %s106
    %s123 = sphi 0, %s107
    %s131 = sphi 0, %s133
    %s134 = sphi 0, %s131
    %s135 = sphi 0, %s134
    %s151 = sphi 0, %s135
  $region4: #{dil_conv.2} parent=0 // loop_header_branch
    %14 = sbr.rel (%p12) target = $region8
  $region5: #{dil_conv.2} parent=0 // loop_body
    %s16 = ssub.s32 %s11, 1
    %s17 = ssub.s32 %s11, 2
    %s24 = sadd.s32 1, %s19
    %p25 = scmp.ge.s32.totalorder %s24, 1
    %s26 = scalar_select %p25, 0, %s24
    %s27 = sadd.s32 1, %s18
    %s28 = scalar_select %p25, %s27, %s18
    %p29 = scmp.ge.s32.totalorder %s28, 2
    %s30 = scalar_select %p29, 0, %s28
    %s31 = ssub.s32 %s18, %s30
    %p32 = scmp.eq.s32.totalorder %s31, 0
    %s34 = sadd.s32 %s33, 1
    %s35 = scalar_select %p32, %s33, %s34
    %p38 = pneg %p32
    %p39 = scmp.eq.s32.totalorder %s11, 1
    %p40 = por %p38, %p39
    %p41 = scmp.ne.s32.totalorder %s33, %s36
    %p42 = scmp.eq.s32.totalorder %s11, 0
    %p43 = por %p41, %p42
    %p44 = scmp.ne.s32.totalorder %s33, %s36
    %p45 = scmp.eq.s32.totalorder %s16, 1
    %p46 = por %p44, %p45
    %p47 = scmp.ne.s32.totalorder %s36, %s37
    %p48 = scmp.eq.s32.totalorder %s16, 0
    %p49 = por %p47, %p48
    %p50 = scmp.ne.s32.totalorder %s36, %s37
    %p51 = scmp.eq.s32.totalorder %s17, 1
    %p52 = por %p50, %p51
    %p54 = scmp.ne.s32.totalorder %s37, %s53
    %p55 = scmp.eq.s32.totalorder %s17, 0
    %p56 = por %p54, %p55
    %s58 = sadd.s32 %s57, 1
    %p61 = scmp.eq.s32.totalorder %s11, 1
    %p62 = scmp.ne.s32.totalorder %s57, %s59
    %p63 = scmp.eq.s32.totalorder %s11, 0
    %p64 = por %p62, %p63
    %p65 = scmp.ne.s32.totalorder %s57, %s59
    %p66 = scmp.eq.s32.totalorder %s16, 1
    %p67 = por %p65, %p66
    %p68 = scmp.ne.s32.totalorder %s59, %s60
    %p69 = scmp.eq.s32.totalorder %s16, 0
    %p70 = por %p68, %p69
    %p71 = scmp.ne.s32.totalorder %s59, %s60
    %p72 = scmp.eq.s32.totalorder %s17, 1
    %p73 = por %p71, %p72
    %p75 = scmp.ne.s32.totalorder %s60, %s74
    %p76 = scmp.eq.s32.totalorder %s17, 0
    %p77 = por %p75, %p76
    %s79 = sadd.s32 %s78, 1
    %p82 = scmp.eq.s32.totalorder %s11, 1
    %p83 = scmp.ne.s32.totalorder %s78, %s80
    %p84 = scmp.eq.s32.totalorder %s11, 0
    %p85 = por %p83, %p84
    %p86 = scmp.ne.s32.totalorder %s78, %s80
    %p87 = scmp.eq.s32.totalorder %s16, 1
    %p88 = por %p86, %p87
    %p89 = scmp.ne.s32.totalorder %s80, %s81
    %p90 = scmp.eq.s32.totalorder %s16, 0
    %p91 = por %p89, %p90
    %p92 = scmp.ne.s32.totalorder %s80, %s81
    %p93 = scmp.eq.s32.totalorder %s17, 1
    %p94 = por %p92, %p93
    %p96 = scmp.ne.s32.totalorder %s81, %s95
    %p97 = scmp.eq.s32.totalorder %s17, 0
    %p98 = por %p96, %p97
    %s99 = ssub.s32 %s18, %s30
    %s100 = ssub.s32 %s19, %s26
    %s101 = sor.u32 %s99, %s100
    %p102 = scmp.eq.s32.totalorder %s101, 0
    %s104 = sadd.s32 %s103, 1
    %s105 = scalar_select %p102, %s103, %s104
    %p108 = pneg %p102
    %p109 = scmp.eq.s32.totalorder %s11, 1
    %p110 = por %p108, %p109
    %p111 = scmp.ne.s32.totalorder %s103, %s106
    %p112 = scmp.eq.s32.totalorder %s11, 0
    %p113 = por %p111, %p112
    %p114 = scmp.ne.s32.totalorder %s103, %s106
    %p115 = scmp.eq.s32.totalorder %s16, 1
    %p116 = por %p114, %p115
    %p117 = scmp.ne.s32.totalorder %s106, %s107
    %p118 = scmp.eq.s32.totalorder %s16, 0
    %p119 = por %p117, %p118
    %p120 = scmp.ne.s32.totalorder %s106, %s107
    %p121 = scmp.eq.s32.totalorder %s17, 1
    %p122 = por %p120, %p121
    %p124 = scmp.ne.s32.totalorder %s107, %s123
    %p125 = scmp.eq.s32.totalorder %s17, 0
    %p126 = por %p124, %p125
    %s127 = ssub.s32 %s18, %s30
    %s128 = ssub.s32 %s19, %s26
    %s129 = sor.u32 %s127, %s128
    %p130 = scmp.eq.s32.totalorder %s129, 0
    %s132 = sadd.s32 %s131, 1
    %s133 = scalar_select %p130, %s131, %s132
    %p136 = pneg %p130
    %p137 = scmp.eq.s32.totalorder %s11, 1
    %p138 = por %p136, %p137
    %p139 = scmp.ne.s32.totalorder %s131, %s134
    %p140 = scmp.eq.s32.totalorder %s11, 0
    %p141 = por %p139, %p140
    %p142 = scmp.ne.s32.totalorder %s131, %s134
    %p143 = scmp.eq.s32.totalorder %s16, 1
    %p144 = por %p142, %p143
    %p145 = scmp.ne.s32.totalorder %s134, %s135
    %p146 = scmp.eq.s32.totalorder %s16, 0
    %p147 = por %p145, %p146
    %p148 = scmp.ne.s32.totalorder %s134, %s135
    %p149 = scmp.eq.s32.totalorder %s17, 1
    %p150 = por %p148, %p149
    %p152 = scmp.ne.s32.totalorder %s135, %s151
    %p153 = scmp.eq.s32.totalorder %s17, 0
    %p154 = por %p152, %p153
    %p155 = scmp.le.s32.totalorder 1, %s11
    %p156 = scmp.lt.s32.totalorder %s11, 3
    %p157 = pnand %p155, %p156
    %p158 = pneg %p157
    // Predicated region
    $region9: #{dil_conv.2} parent=5 // pred_check
      _
    $region10: #{dil_conv.2} parent=5 // pred_check_branch
      %160 = sbr.rel (%p157) target = $region12
    $region11: #{dil_conv.2} parent=5 // pred_region
      %s161 = ssub.s32 %s11, 1
      // Predicated region
      $region13: #{dil_conv.2} parent=11 // pred_check
        %p162 = pneg %p70
      $region14: #{dil_conv.2} parent=11 // pred_check_branch
        %164 = sbr.rel (%p162) target = $region16
      $region15: #{dil_conv.2} parent=11 // pred_region
        _
      $region16: #{dil_conv.2} parent=11 // pred_fallthru
        _
      // Predicated region
      $region17: #{dil_conv.2} parent=11 // pred_check
        %p165 = pneg %p91
      $region18: #{dil_conv.2} parent=11 // pred_check_branch
        %167 = sbr.rel (%p165) target = $region20
      $region19: #{dil_conv.2} parent=11 // pred_region
        _
      $region20: #{dil_conv.2} parent=11 // pred_fallthru
        _
    $region12: #{dil_conv.2} parent=5 // pred_fallthru
      _
    %p168 = scmp.lt.s32.totalorder %s11, 2
    // Predicated region
    $region21: #{dil_conv.2} parent=5 // pred_check
      %p169 = pneg %p168
    $region22: #{dil_conv.2} parent=5 // pred_check_branch
      %171 = sbr.rel (%p169) target = $region24
    $region23: #{dil_conv.2} parent=5 // pred_region
      // Predicated region
      $region25: #{dil_conv.2} parent=23 // pred_check
        %p172 = pneg %p43
      $region26: #{dil_conv.2} parent=23 // pred_check_branch
        %174 = sbr.rel (%p172) target = $region28
      $region27: #{dil_conv.2} parent=23 // pred_region
        %p175 = scmp.lt.s32.totalorder %s18, 1
        %s176 = scalar_select %p175, %s18, 1
        %s177 = smul.addr %s176, 3
        %s178 = smul.addr %s177, 8
        %s179 = scalar_lea.vmem %s0, %s178
      $region28: #{dil_conv.2} parent=23 // pred_fallthru
        _
    $region24: #{dil_conv.2} parent=5 // pred_fallthru
      _
    %p180 = scmp.le.s32.totalorder 1, %s11
    %p181 = scmp.lt.s32.totalorder %s11, 3
    %p182 = pnand %p180, %p181
    %p183 = pneg %p182
    // Predicated region
    $region29: #{dil_conv.2} parent=5 // pred_check
      _
    $region30: #{dil_conv.2} parent=5 // pred_check_branch
      %185 = sbr.rel (%p182) target = $region32
    $region31: #{dil_conv.2} parent=5 // pred_region
      %s186 = ssub.s32 %s11, 1
      %p187 = scmp.lt.s32.totalorder %s20, 1
      %s188 = scalar_select %p187, %s20, 1
      %s189 = smul.addr %s188, 3
      %s190 = smul.addr %s189, 8
      %s191 = scalar_lea.vmem %s0, %s190
      %p192 = pneg %p49
      %p193 = pneg %p46
      %p194 = pneg %p70
      %p195 = pneg %p67
      %p196 = pneg %p91
      %p197 = pneg %p88
      %p198 = pneg %p119
      %p199 = pneg %p116
      %s200 = smul.u32 2, %s21
      %p201 = scmp.lt.s32.totalorder %s20, 1
      %s202 = scalar_select %p201, %s20, 1
      %p203 = scmp.lt.s32.totalorder %s200, 1
      %s204 = scalar_select %p203, %s200, 1
      %s205 = smul.addr %s202, 2
      %s206 = sadd.s32 %s204, %s205
      %s207 = smul.addr %s206, 4
      %s208 = scalar_lea.vmem %s3, %s207
      %p209 = pneg %p147
      %p210 = pneg %p144
      %p211 = scmp.lt.s32.totalorder %s20, 1
      %s212 = scalar_select %p211, %s20, 1
      %p213 = scmp.lt.s32.totalorder %s21, 0
      %s214 = scalar_select %p213, %s21, 0
      %s215 = sadd.s32 %s214, %s212
      %s216 = smul.addr %s215, 2
      %s217 = scalar_lea.vmem %s4, %s216
      %p218 = scmp.lt.s32.totalorder %s20, 1
      %s219 = scalar_select %p218, %s20, 1
      %s220 = smul.addr %s219, 3
      %s221 = smul.addr %s220, 8
      %s222 = scalar_lea.vmem %s0, %s221
      %s223 = smul.u32 2, %s21
      %p224 = scmp.lt.s32.totalorder %s20, 1
      %s225 = scalar_select %p224, %s20, 1
      %p226 = scmp.lt.s32.totalorder %s223, 1
      %s227 = scalar_select %p226, %s223, 1
      %s228 = smul.addr %s225, 2
      %s229 = sadd.s32 %s227, %s228
      %s230 = smul.addr %s229, 4
      %s231 = scalar_lea.vmem %s3, %s230
      %s232 = smul.u32 2, %s21
      %p233 = scmp.lt.s32.totalorder %s20, 1
      %s234 = scalar_select %p233, %s20, 1
      %p235 = scmp.lt.s32.totalorder %s21, 0
      %s236 = scalar_select %p235, %s21, 0
      %s237 = sadd.s32 %s236, %s234
      %s238 = smul.addr %s237, 2
      %s239 = scalar_lea.vmem %s4, %s238
      %s240 = smul.u32 %s21, 16
      %s241 = scalar_lea.vmem %s222, %s240
      %v242 = vld [vmem:[%s241] sm:$0xff]
      %v243 = vld [vmem:[%s241 + $0x8] sm:$0xff]
      %v244 = vld [vmem:[%s241 + $0x10] sm:$0xf]
      %v245 = vmax.f32 %v242, 0.0
      %v246 = vmax.f32 %v243, 0.0
      %v247 = vmax.f32 %v244, 0.0
      %v248 = vld [vmem:[%s1] sm:$0xff]
      %v249 = vld [vmem:[%s1 + $0x8] sm:$0x1]
      %v250 = vlaneseq
      %v251 = vshrl.u32 %v250, 7
      %v252 = vsub.s32 0, %v251
      %v253 = vrot.slane %v248, %v252
      %v254 = vmul.f32 %v245, %v253
      %v255 = vmul.f32 %v246, %v253
      %v256 = vlaneseq
      %v257 = vshrl.u32 %v256, 7
      %v258 = vsub.s32 1, %v257
      %v259 = vrot.slane %v248, %v258
      %261 = vrot.lane.b32.xlu0 %v259, 8
      %v262 = vpop.permute.xlu0 %261
      %v264 = vmul.f32 %v245, %v262
      %v265 = vmul.f32 %v246, %v262
      %268 = vrot.lane.b32.xlu0 %v264, 120
      %v269 = vpop.permute.xlu0 %268
      %270 = vrot.lane.b32.xlu0 %v265, 120
      %v271 = vpop.permute.xlu0 %270
      %v274 = vadd.f32 %v254, %v269
      %v275 = vadd.f32 %v255, %v271
      %v276 = vlaneseq
      %v277 = vshrl.u32 %v276, 7
      %v278 = vsub.s32 2, %v277
      %v279 = vrot.slane %v248, %v278
      %281 = vrot.lane.b32.xlu0 %v279, 16
      %v282 = vpop.permute.xlu0 %281
      %v284 = vmul.f32 %v245, %v282
      %v285 = vmul.f32 %v246, %v282
      %288 = vrot.lane.b32.xlu0 %v284, 112
      %v289 = vpop.permute.xlu0 %288
      %290 = vrot.lane.b32.xlu0 %v285, 112
      %v291 = vpop.permute.xlu0 %290
      %v294 = vadd.f32 %v274, %v289
      %v295 = vadd.f32 %v275, %v291
      %v296 = vlaneseq
      %v297 = vshrl.u32 %v296, 7
      %v298 = vsub.s32 3, %v297
      %v299 = vrot.slane %v248, %v298
      %v300 = vmul.f32 %v245, %v299
      %v301 = vmul.f32 %v246, %v299
      %v302 = vmul.f32 %v247, %v299
      %vm306 = vcmask 1045504
      %v307 = vrot.slane %v300, 2
      %v308 = vrot.slane %v301, 2
      %v309 = vsel %vm306, %v307, %v308
      %v310 = vrot.slane %v302, 2
      %v311 = vsel %vm306, %v308, %v310
      %v314 = vadd.f32 %v294, %v309
      %v315 = vadd.f32 %v295, %v311
      %v316 = vlaneseq
      %v317 = vshrl.u32 %v316, 7
      %v318 = vsub.s32 4, %v317
      %v319 = vrot.slane %v248, %v318
      %321 = vrot.lane.b32.xlu0 %v319, 8
      %v322 = vpop.permute.xlu0 %321
      %v324 = vmul.f32 %v245, %v322
      %v325 = vmul.f32 %v246, %v322
      %v326 = vmul.f32 %v247, %v322
      %v330 = vrot.slane %v324, 2
      %v331 = vrot.slane %v325, 2
      %v332 = vsel %vm306, %v330, %v331
      %v333 = vrot.slane %v326, 2
      %v334 = vsel %vm306, %v331, %v333
      %335 = vrot.lane.b32.xlu0 %v332, 120
      %v336 = vpop.permute.xlu0 %335
      %337 = vrot.lane.b32.xlu0 %v334, 120
      %v338 = vpop.permute.xlu0 %337
      %v341 = vadd.f32 %v314, %v336
      %v342 = vadd.f32 %v315, %v338
      %v343 = vlaneseq
      %v344 = vshrl.u32 %v343, 7
      %v345 = vsub.s32 5, %v344
      %v346 = vrot.slane %v248, %v345
      %348 = vrot.lane.b32.xlu0 %v346, 16
      %v349 = vpop.permute.xlu0 %348
      %v351 = vmul.f32 %v245, %v349
      %v352 = vmul.f32 %v246, %v349
      %v353 = vmul.f32 %v247, %v349
      %v357 = vrot.slane %v351, 2
      %v358 = vrot.slane %v352, 2
      %v359 = vsel %vm306, %v357, %v358
      %v360 = vrot.slane %v353, 2
      %v361 = vsel %vm306, %v358, %v360
      %362 = vrot.lane.b32.xlu0 %v359, 112
      %v363 = vpop.permute.xlu0 %362
      %364 = vrot.lane.b32.xlu0 %v361, 112
      %v365 = vpop.permute.xlu0 %364
      %v368 = vadd.f32 %v341, %v363
      %v369 = vadd.f32 %v342, %v365
      %v370 = vlaneseq
      %v371 = vshrl.u32 %v370, 7
      %v372 = vsub.s32 6, %v371
      %v373 = vrot.slane %v248, %v372
      %v374 = vmul.f32 %v245, %v373
      %v375 = vmul.f32 %v246, %v373
      %v376 = vmul.f32 %v247, %v373
      %vm380 = vcmask 1043456
      %v381 = vrot.slane %v374, 4
      %v382 = vrot.slane %v375, 4
      %v383 = vsel %vm380, %v381, %v382
      %v384 = vrot.slane %v376, 4
      %v385 = vsel %vm380, %v382, %v384
      %v388 = vadd.f32 %v368, %v383
      %v389 = vadd.f32 %v369, %v385
      %v390 = vlaneseq
      %v391 = vshrl.u32 %v390, 7
      %v392 = vsub.s32 7, %v391
      %v393 = vrot.slane %v248, %v392
      %395 = vrot.lane.b32.xlu0 %v393, 8
      %v396 = vpop.permute.xlu0 %395
      %v398 = vmul.f32 %v245, %v396
      %v399 = vmul.f32 %v246, %v396
      %v400 = vmul.f32 %v247, %v396
      %v404 = vrot.slane %v398, 4
      %v405 = vrot.slane %v399, 4
      %v406 = vsel %vm380, %v404, %v405
      %v407 = vrot.slane %v400, 4
      %v408 = vsel %vm380, %v405, %v407
      %409 = vrot.lane.b32.xlu0 %v406, 120
      %v410 = vpop.permute.xlu0 %409
      %411 = vrot.lane.b32.xlu0 %v408, 120
      %v412 = vpop.permute.xlu0 %411
      %v415 = vadd.f32 %v388, %v410
      %v416 = vadd.f32 %v389, %v412
      %v417 = vlaneseq
      %v418 = vshrl.u32 %v417, 7
      %v419 = vsub.s32 0, %v418
      %v420 = vrot.slane %v249, %v419
      %422 = vrot.lane.b32.xlu0 %v420, 16
      %v423 = vpop.permute.xlu0 %422
      %v425 = vmul.f32 %v245, %v423
      %v426 = vmul.f32 %v246, %v423
      %v427 = vmul.f32 %v247, %v423
      %v431 = vrot.slane %v425, 4
      %v432 = vrot.slane %v426, 4
      %v433 = vsel %vm380, %v431, %v432
      %v434 = vrot.slane %v427, 4
      %v435 = vsel %vm380, %v432, %v434
      %436 = vrot.lane.b32.xlu0 %v433, 112
      %v437 = vpop.permute.xlu0 %436
      %438 = vrot.lane.b32.xlu0 %v435, 112
      %v439 = vpop.permute.xlu0 %438
      %v442 = vadd.f32 %v415, %v437
      %v443 = vadd.f32 %v416, %v439
      %v444 = vld [vmem:[%s2] sm:$0xff]
      %v445 = vld [vmem:[%s2 + $0x8] sm:$0xff]
      %v446 = vld [vmem:[%s2 + $0x10] sm:$0xff]
      %v447 = vld [vmem:[%s2 + $0x18] sm:$0xff]
      %v448 = vld [vmem:[%s2 + $0x20] sm:$0xff]
      %v449 = vld [vmem:[%s2 + $0x28] sm:$0xff]
      %v450 = vld [vmem:[%s2 + $0x30] sm:$0xff]
      %v451 = vld [vmem:[%s2 + $0x38] sm:$0xff]
      %vm452 = vcmask 523264
      %v454 = vsel %vm452, %v442, 0
      %v457 = vsel %vm452, %v443, 0
      %459 = vmatprep.subr.mxu0 0.0
      %460 = vmatpush1.msra.mxu0 %v444
      %461 = vmatprep.subr.mxu0 0.0
      %462 = vmatpush1.msra.mxu0 %v445
      %463 = vmatprep.subr.mxu0 0.0
      %464 = vmatpush1.msra.mxu0 %v446
      %465 = vmatprep.subr.mxu0 0.0
      %466 = vmatpush1.msra.mxu0 %v447
      %467 = vmatprep.subr.mxu0 0.0
      %468 = vmatpush1.msra.mxu0 %v448
      %469 = vmatprep.subr.mxu0 0.0
      %470 = vmatpush1.msra.mxu0 %v449
      %471 = vmatprep.subr.mxu0 0.0
      %472 = vmatpush1.msra.mxu0 %v450
      %473 = vmatprep.subr.mxu0 0.0
      %474 = vmatpush1.msra.mxu0 %v451
      %475 = vmatprep.subr.mxu0 0.0
      %476 = vmatpush1.msra.mxu0 0.0
      %477 = vmatprep.subr.mxu0 0.0
      %478 = vmatpush1.msra.mxu0 0.0
      %479 = vmatprep.subr.mxu0 0.0
      %480 = vmatpush1.msra.mxu0 0.0
      %481 = vmatprep.subr.mxu0 0.0
      %482 = vmatpush1.msra.mxu0 0.0
      %483 = vmatprep.subr.mxu0 0.0
      %484 = vmatpush1.msra.mxu0 0.0
      %485 = vmatprep.subr.mxu0 0.0
      %486 = vmatpush1.msra.mxu0 0.0
      %487 = vmatprep.subr.mxu0 0.0
      %488 = vmatpush1.msra.mxu0 0.0
      %489 = vmatprep.subr.mxu0 0.0
      %490 = vmatpush1.msra.mxu0 0.0
      %491 = vmatprep.subr.mxu0 0.0
      %492 = vmatpush1.msra.mxu0 0.0
      %493 = vmatprep.subr.mxu0 0.0
      %494 = vmatpush1.msra.mxu0 0.0
      %495 = vmatprep.subr.mxu0 0.0
      %496 = vmatpush1.msra.mxu0 0.0
      %497 = vmatprep.subr.mxu0 0.0
      %498 = vmatpush1.msra.mxu0 0.0
      %499 = vmatprep.subr.mxu0 0.0
      %500 = vmatpush1.msra.mxu0 0.0
      %501 = vmatprep.subr.mxu0 0.0
      %502 = vmatpush1.msra.mxu0 0.0
      %503 = vmatprep.subr.mxu0 0.0
      %504 = vmatpush1.msra.mxu0 0.0
      %505 = vmatprep.subr.mxu0 0.0
      %506 = vmatpush1.msra.mxu0 0.0
      %507 = vmatprep.subr.mxu0 0.0
      %508 = vmatpush1.msra.mxu0 0.0
      %509 = vmatprep.subr.mxu0 0.0
      %510 = vmatpush1.msra.mxu0 0.0
      %511 = vmatprep.subr.mxu0 0.0
      %512 = vmatpush1.msra.mxu0 0.0
      %513 = vmatprep.subr.mxu0 0.0
      %514 = vmatpush1.msra.mxu0 0.0
      %515 = vmatprep.subr.mxu0 0.0
      %516 = vmatpush1.msra.mxu0 0.0
      %517 = vmatprep.subr.mxu0 0.0
      %518 = vmatpush1.msra.mxu0 0.0
      %519 = vmatprep.subr.mxu0 0.0
      %520 = vmatpush1.msra.mxu0 0.0
      %521 = vmatprep.subr.mxu0 0.0
      %522 = vmatpush1.msra.mxu0 0.0
      %523 = vmatprep.mubr.f32.mxu0 0.0
      %524 = vmatmul.mubr.f32.gmra.mrb[0].mxu0 %v454
      %v525 = vpop.f32.mrb[0].mxu0
      %v526 = vadd.f32 0.0, %v525
      %v527 = vpop.f32.mrb[0].mxu0
      %528 = vmatprep.mubr.f32.mxu0 0.0
      %529 = vmatmul.mubr.f32.gmra.mrb[0].mxu0 %v457
      %v530 = vpop.f32.mrb[0].mxu0
      %v531 = vadd.f32 0.0, %v530
      %v532 = vpop.f32.mrb[0].mxu0
      %533 = vdwg.mxu0
      %v534 = vadd.f32 %v526, %v531
      %v535 = vrot.slane %v534, 4
      %v536 = vadd.f32 %v534, %v535
      %v537 = vrot.slane %v536, 2
      %v538 = vadd.f32 %v536, %v537
      %v539 = vrot.slane %v538, 1
      %v540 = vadd.f32 %v538, %v539
      %v541 = vmul.f32 %v526, %v526
      %v542 = vmul.f32 %v531, %v531
      %v543 = vadd.f32 %v541, %v542
      %v544 = vrot.slane %v543, 4
      %v545 = vadd.f32 %v543, %v544
      %v546 = vrot.slane %v545, 2
      %v547 = vadd.f32 %v545, %v546
      %v548 = vrot.slane %v547, 1
      %v549 = vadd.f32 %v547, %v548
      %v550 = vlaneseq
      %v551 = vshrl.u32 %v550, 7
      %vm552 = vcmp.eq.s32.totalorder %v551, 0
      %v553 = vsel %vm552, %v540, %v549
      %554 = vst [vmem:[%s239] sm:$0x3] %v553
      %v555 = vpack.c.bf16 %v531, %v526
      %v557 = vunpack.c.l.b16 %v555
      %v558 = vunpack.c.h.b16 %v555
      %v559 = vpack.c.b16 %v557, %v557
      %v560 = vpack.c.b16 %v558, %v558
      %563 = vst [vmem:[%s231] sm:$0xf] %v559
      %564 = vst [vmem:[%s231 + $0x4] sm:$0xf] %v560
      %s565 = smul.u32 2, %s21
      %p566 = scmp.lt.s32.totalorder %s20, 1
      %s567 = scalar_select %p566, %s20, 1
      %p568 = scmp.lt.s32.totalorder %s565, 1
      %s569 = scalar_select %p568, %s565, 1
      %s570 = smul.addr %s567, 2
      %s571 = sadd.s32 %s569, %s570
      %s572 = smul.addr %s571, 4
      %s573 = scalar_lea.vmem %s3, %s572
      %p574 = scmp.lt.s32.totalorder %s20, 1
      %s575 = scalar_select %p574, %s20, 1
      %p576 = scmp.lt.s32.totalorder %s21, 0
      %s577 = scalar_select %p576, %s21, 0
      %s578 = sadd.s32 %s577, %s575
      %s579 = smul.addr %s578, 2
      %s580 = scalar_lea.vmem %s4, %s579
      // Predicated region
      $region33: #{dil_conv.2} parent=31 // pred_check
        %p581 = pneg %p116
      $region34: #{dil_conv.2} parent=31 // pred_check_branch
        %583 = sbr.rel (%p581) target = $region36
      $region35: #{dil_conv.2} parent=31 // pred_region
        %s584 = smul.u32 2, %s21
      $region36: #{dil_conv.2} parent=31 // pred_fallthru
        _
      // Predicated region
      $region37: #{dil_conv.2} parent=31 // pred_check
        %p585 = pneg %p144
      $region38: #{dil_conv.2} parent=31 // pred_check_branch
        %587 = sbr.rel (%p585) target = $region40
      $region39: #{dil_conv.2} parent=31 // pred_region
        _
      $region40: #{dil_conv.2} parent=31 // pred_fallthru
        _
    $region32: #{dil_conv.2} parent=5 // pred_fallthru
      _
    %p588 = scmp.le.s32.totalorder 2, %s11
    // Predicated region
    $region41: #{dil_conv.2} parent=5 // pred_check
      %p589 = pneg %p588
    $region42: #{dil_conv.2} parent=5 // pred_check_branch
      %591 = sbr.rel (%p589) target = $region44
    $region43: #{dil_conv.2} parent=5 // pred_region
      %s592 = ssub.s32 %s11, 2
      // Predicated region
      $region45: #{dil_conv.2} parent=43 // pred_check
        %p593 = pneg %p122
      $region46: #{dil_conv.2} parent=43 // pred_check_branch
        %595 = sbr.rel (%p593) target = $region48
      $region47: #{dil_conv.2} parent=43 // pred_region
        %s596 = smul.u32 2, %s23
        %p597 = scmp.lt.s32.totalorder %s22, 1
        %s598 = scalar_select %p597, %s22, 1
        %p599 = scmp.lt.s32.totalorder %s596, 1
        %s600 = scalar_select %p599, %s596, 1
        %s601 = smul.addr %s598, 2
        %s602 = sadd.s32 %s600, %s601
        %s603 = smul.addr %s602, 4
        %s604 = scalar_lea.vmem %s3, %s603
      $region48: #{dil_conv.2} parent=43 // pred_fallthru
        _
      // Predicated region
      $region49: #{dil_conv.2} parent=43 // pred_check
        %p605 = pneg %p150
      $region50: #{dil_conv.2} parent=43 // pred_check_branch
        %607 = sbr.rel (%p605) target = $region52
      $region51: #{dil_conv.2} parent=43 // pred_region
        %p608 = scmp.lt.s32.totalorder %s22, 1
        %s609 = scalar_select %p608, %s22, 1
        %p610 = scmp.lt.s32.totalorder %s23, 0
        %s611 = scalar_select %p610, %s23, 0
        %s612 = sadd.s32 %s611, %s609
        %s613 = smul.addr %s612, 2
        %s614 = scalar_lea.vmem %s4, %s613
      $region52: #{dil_conv.2} parent=43 // pred_fallthru
        _
    $region44: #{dil_conv.2} parent=5 // pred_fallthru
      _
  $region6: #{dil_conv.2} parent=0 // loop_footer
    %s15 = sadd.s32 1, %s11
  $region7: #{dil_conv.2} parent=0 // loop_footer_branch
    %10 = sbr.rel target = $region3
  $region8: #{dil_conv.2} parent=0 // loop_exit
    _

</llo_original>
